<compile_context>
chip_gen: v6e
topology: v6e:2x2x1
jax: 0.10.0
libtpu: 0.0.40
codegen_flags: <defaults>
</compile_context>

<pallas_src>
import jax
import jax.numpy as jnp
from jax.experimental import pallas as pl
from jax.experimental.pallas import tpu as pltpu


def _round_up(v, m):
    return ((v + m - 1) // m) * m


def _pad2(a, rows, cols):
    return jnp.pad(a, ((0, rows - a.shape[0]), (0, cols - a.shape[1])))


def _leaky_relu(v, slope=0.2):
    return jnp.where(v > 0, v, slope * v)


def generator_kernel(x_ref,
                     w1_ref, b1_ref,
                     w2_ref, b2_ref,
                     w3_ref, b3_ref,
                     w4_ref, b4_ref,
                     o_ref):
    # x / w refs are bf16 (MXU native); accumulate in f32; elementwise in f32.
    h = jnp.dot(x_ref[...], w1_ref[...], preferred_element_type=jnp.float32)
    h = _leaky_relu(h + b1_ref[...]).astype(jnp.bfloat16)

    h = jnp.dot(h, w2_ref[...], preferred_element_type=jnp.float32)
    h = _leaky_relu(h + b2_ref[...]).astype(jnp.bfloat16)

    h = jnp.dot(h, w3_ref[...], preferred_element_type=jnp.float32)
    h = _leaky_relu(h + b3_ref[...]).astype(jnp.bfloat16)

    h = jnp.dot(h, w4_ref[...], preferred_element_type=jnp.float32)
    o_ref[...] = jnp.tanh(h + b4_ref[...])


def generator_forward(x, params, *, tile_b=256):
    """x: [B, input_size] f32. params: w1..w4 ([in,out]) and b1..b4 ([1,out])."""
    B, in_dim = x.shape
    dims = [in_dim,
            params["w1"].shape[1],
            params["w2"].shape[1],
            params["w3"].shape[1],
            params["w4"].shape[1]]
    out_dim = dims[4]

    # Lane-dense feature widths (multiples of 128). Zero padding is exact.
    pdims = [_round_up(d, 128) for d in dims]

    # Batch tile: multiple of 8 (sublane), as large as reasonable.
    TB = min(tile_b, _round_up(B, 8))
    Bp = _round_up(B, TB)

    x_p = _pad2(x, Bp, pdims[0]).astype(jnp.bfloat16)
    ws, bs = [], []
    for i in range(4):
        ws.append(_pad2(params[f"w{i+1}"], pdims[i], pdims[i + 1]).astype(jnp.bfloat16))
        bs.append(_pad2(params[f"b{i+1}"], 1, pdims[i + 1]).astype(jnp.float32))

    args = (x_p, ws[0], bs[0], ws[1], bs[1], ws[2], bs[2], ws[3], bs[3])

    in_specs = [pl.BlockSpec((TB, pdims[0]), lambda i: (i, 0))]
    for k in range(4):
        in_specs.append(pl.BlockSpec((pdims[k], pdims[k + 1]), lambda i: (0, 0)))
        in_specs.append(pl.BlockSpec((1, pdims[k + 1]), lambda i: (0, 0)))
    out_spec = pl.BlockSpec((TB, pdims[4]), lambda i: (i, 0))

    # VMEM budget: double-buffered x/out tiles + resident weights/biases +
    # activation headroom. Capped to stay inside v7x's 64 MiB physical VMEM.
    bytes_tiles = 2 * (TB * pdims[0] * 2 + TB * pdims[4] * 4)
    bytes_w = 2 * sum(pdims[k] * pdims[k + 1] * 2 for k in range(4))
    bytes_b = 2 * sum(pdims[k + 1] * 4 for k in range(4))
    bytes_act = 2 * TB * max(pdims) * 4
    vmem_need = bytes_tiles + bytes_w + bytes_b + bytes_act
    vmem_limit = int(min(max(2 * vmem_need, 32 * 1024 * 1024), 64 * 1024 * 1024))
    # TODO(synk): if resident weights alone exceed ~40 MiB (huge hidden_dim on v7x),
    # tile the widest layer (w3) over an extra grid axis instead of keeping it resident.

    flops = 2 * B * sum(dims[k] * dims[k + 1] for k in range(4))
    bytes_accessed = (x_p.size * 2
                      + sum(w.size * 2 for w in ws)
                      + sum(b.size * 4 for b in bs)
                      + Bp * pdims[4] * 4)

    out_p = pl.pallas_call(
        generator_kernel,
        out_shape=jax.ShapeDtypeStruct((Bp, pdims[4]), jnp.float32),
        grid=(Bp // TB,),
        in_specs=in_specs,
        out_specs=out_spec,
        compiler_params=pltpu.CompilerParams(
            dimension_semantics=("parallel",),
            vmem_limit_bytes=vmem_limit),
        cost_estimate=pl.CostEstimate(
            flops=flops,
            transcendentals=B * out_dim,
            bytes_accessed=bytes_accessed),
    )(*args)

    return out_p[:B, :out_dim]


def init_generator_params(key, input_size, hidden_dim, output_size):
    """Deterministic init mimicking nn.Linear default (uniform +-1/sqrt(fan_in))."""
    dims = [(input_size, hidden_dim),
            (hidden_dim, hidden_dim * 2),
            (hidden_dim * 2, hidden_dim * 4),
            (hidden_dim * 4, output_size)]
    params = {}
    for i, (fan_in, fan_out) in enumerate(dims, start=1):
        key, kw, kb = jax.random.split(key, 3)
        bound = 1.0 / jnp.sqrt(fan_in)
        params[f"w{i}"] = jax.random.uniform(
            kw, (fan_in, fan_out), jnp.float32, -bound, bound)
        params[f"b{i}"] = jax.random.uniform(
            kb, (1, fan_out), jnp.float32, -bound, bound)
    return params


def reference_forward(x, params, dtype=jnp.float32):
    h = x
    for i in range(1, 5):
        w = params[f"w{i}"].astype(dtype)
        h = jnp.dot(h.astype(dtype), w,
                    preferred_element_type=jnp.float32) + params[f"b{i}"]
        if i < 4:
            h = jnp.where(h > 0, h, 0.2 * h)
    return jnp.tanh(h)


if __name__ == "__main__":
    input_size, hidden_dim, output_size = 16, 32, 16
    batch = 8

    key = jax.random.PRNGKey(0)
    key, kx = jax.random.split(key)
    x = jax.random.normal(kx, (batch, input_size), jnp.float32)
    params = init_generator_params(key, input_size, hidden_dim, output_size)

    out = jax.block_until_ready(generator_forward(x, params))
    assert out.shape == (batch, output_size)

    # Tight check vs a numerics-matched (bf16 matmul, f32 accumulate) reference,
    # loose check vs the pure-f32 reference (bf16 operand rounding).
    ref_bf16 = reference_forward(x, params, jnp.bfloat16)
    ref_f32 = reference_forward(x, params, jnp.float32)
    assert jnp.allclose(out, ref_bf16, atol=5e-3, rtol=5e-3)
    assert jnp.allclose(out, ref_f32, atol=5e-2, rtol=5e-2)

    print("KERNEL_OK")
</pallas_src>

<mosaic_0001>
module attributes {stable_mosaic.version = 11 : i64} {
  func.func @generator_kernel(%arg0: i32, %arg1: memref<8x128xbf16, #tpu.memory_space<vmem>>, %arg2: memref<128x128xbf16, #tpu.memory_space<vmem>>, %arg3: memref<1x128xf32, #tpu.memory_space<vmem>>, %arg4: memref<128x128xbf16, #tpu.memory_space<vmem>>, %arg5: memref<1x128xf32, #tpu.memory_space<vmem>>, %arg6: memref<128x128xbf16, #tpu.memory_space<vmem>>, %arg7: memref<1x128xf32, #tpu.memory_space<vmem>>, %arg8: memref<128x128xbf16, #tpu.memory_space<vmem>>, %arg9: memref<1x128xf32, #tpu.memory_space<vmem>>, %arg10: memref<8x128xf32, #tpu.memory_space<vmem>>) attributes {dimension_semantics = [#tpu.dimension_semantics<parallel>], iteration_bounds = array<i64: 1>, scalar_prefetch = 0 : i64, scratch_operands = 0 : i64, tpu.core_type = #tpu.core_type<tc>, window_params = [{transform_indices = @transform_0, window_bounds = array<i64: 8, 128>}, {pipeline_mode = #tpu.pipeline_mode<synchronous>, transform_indices = @transform_1, window_bounds = array<i64: 128, 128>}, {pipeline_mode = #tpu.pipeline_mode<synchronous>, transform_indices = @transform_2, window_bounds = array<i64: 1, 128>}, {pipeline_mode = #tpu.pipeline_mode<synchronous>, transform_indices = @transform_3, window_bounds = array<i64: 128, 128>}, {pipeline_mode = #tpu.pipeline_mode<synchronous>, transform_indices = @transform_4, window_bounds = array<i64: 1, 128>}, {pipeline_mode = #tpu.pipeline_mode<synchronous>, transform_indices = @transform_5, window_bounds = array<i64: 128, 128>}, {pipeline_mode = #tpu.pipeline_mode<synchronous>, transform_indices = @transform_6, window_bounds = array<i64: 1, 128>}, {pipeline_mode = #tpu.pipeline_mode<synchronous>, transform_indices = @transform_7, window_bounds = array<i64: 128, 128>}, {pipeline_mode = #tpu.pipeline_mode<synchronous>, transform_indices = @transform_8, window_bounds = array<i64: 1, 128>}, {transform_indices = @transform_9, window_bounds = array<i64: 8, 128>}]} {
    %c0 = arith.constant 0 : index
    %c0_0 = arith.constant 0 : index
    %0 = vector.load %arg1[%c0, %c0_0] : memref<8x128xbf16, #tpu.memory_space<vmem>>, vector<8x128xbf16>
    %c0_1 = arith.constant 0 : index
    %c0_2 = arith.constant 0 : index
    %1 = vector.load %arg2[%c0_1, %c0_2] : memref<128x128xbf16, #tpu.memory_space<vmem>>, vector<128x128xbf16>
    %cst = arith.constant dense<0.000000e+00> : vector<8x128xf32>
    %2 = tpu.matmul %0, %1, %cst {dimension_numbers = #tpu.dot_dimension_numbers<[1], [0], [0], [1], [0, 0, 1, 1], [], []>} : vector<8x128xbf16>, vector<128x128xbf16>, vector<8x128xf32> -> vector<8x128xf32>
    %c0_3 = arith.constant 0 : index
    %c0_4 = arith.constant 0 : index
    %3 = vector.load %arg3[%c0_3, %c0_4] : memref<1x128xf32, #tpu.memory_space<vmem>>, vector<1x128xf32>
    %4 = vector.broadcast %3 : vector<1x128xf32> to vector<8x128xf32>
    %5 = arith.addf %2, %4 : vector<8x128xf32>
    %cst_5 = arith.constant 0.000000e+00 : f32
    %6 = vector.broadcast %cst_5 : f32 to vector<8x128xf32>
    %7 = arith.cmpf ogt, %5, %6 : vector<8x128xf32>
    %cst_6 = arith.constant 2.000000e-01 : f32
    %8 = vector.broadcast %cst_6 : f32 to vector<8x128xf32>
    %9 = arith.mulf %8, %5 : vector<8x128xf32>
    %10 = arith.select %7, %5, %9 : vector<8x128xi1>, vector<8x128xf32>
    %11 = arith.truncf %10 : vector<8x128xf32> to vector<8x128xbf16>
    %c0_7 = arith.constant 0 : index
    %c0_8 = arith.constant 0 : index
    %12 = vector.load %arg4[%c0_7, %c0_8] : memref<128x128xbf16, #tpu.memory_space<vmem>>, vector<128x128xbf16>
    %cst_9 = arith.constant dense<0.000000e+00> : vector<8x128xf32>
    %13 = tpu.matmul %11, %12, %cst_9 {dimension_numbers = #tpu.dot_dimension_numbers<[1], [0], [0], [1], [0, 0, 1, 1], [], []>} : vector<8x128xbf16>, vector<128x128xbf16>, vector<8x128xf32> -> vector<8x128xf32>
    %c0_10 = arith.constant 0 : index
    %c0_11 = arith.constant 0 : index
    %14 = vector.load %arg5[%c0_10, %c0_11] : memref<1x128xf32, #tpu.memory_space<vmem>>, vector<1x128xf32>
    %15 = vector.broadcast %14 : vector<1x128xf32> to vector<8x128xf32>
    %16 = arith.addf %13, %15 : vector<8x128xf32>
    %cst_12 = arith.constant 0.000000e+00 : f32
    %17 = vector.broadcast %cst_12 : f32 to vector<8x128xf32>
    %18 = arith.cmpf ogt, %16, %17 : vector<8x128xf32>
    %cst_13 = arith.constant 2.000000e-01 : f32
    %19 = vector.broadcast %cst_13 : f32 to vector<8x128xf32>
    %20 = arith.mulf %19, %16 : vector<8x128xf32>
    %21 = arith.select %18, %16, %20 : vector<8x128xi1>, vector<8x128xf32>
    %22 = arith.truncf %21 : vector<8x128xf32> to vector<8x128xbf16>
    %c0_14 = arith.constant 0 : index
    %c0_15 = arith.constant 0 : index
    %23 = vector.load %arg6[%c0_14, %c0_15] : memref<128x128xbf16, #tpu.memory_space<vmem>>, vector<128x128xbf16>
    %cst_16 = arith.constant dense<0.000000e+00> : vector<8x128xf32>
    %24 = tpu.matmul %22, %23, %cst_16 {dimension_numbers = #tpu.dot_dimension_numbers<[1], [0], [0], [1], [0, 0, 1, 1], [], []>} : vector<8x128xbf16>, vector<128x128xbf16>, vector<8x128xf32> -> vector<8x128xf32>
    %c0_17 = arith.constant 0 : index
    %c0_18 = arith.constant 0 : index
    %25 = vector.load %arg7[%c0_17, %c0_18] : memref<1x128xf32, #tpu.memory_space<vmem>>, vector<1x128xf32>
    %26 = vector.broadcast %25 : vector<1x128xf32> to vector<8x128xf32>
    %27 = arith.addf %24, %26 : vector<8x128xf32>
    %cst_19 = arith.constant 0.000000e+00 : f32
    %28 = vector.broadcast %cst_19 : f32 to vector<8x128xf32>
    %29 = arith.cmpf ogt, %27, %28 : vector<8x128xf32>
    %cst_20 = arith.constant 2.000000e-01 : f32
    %30 = vector.broadcast %cst_20 : f32 to vector<8x128xf32>
    %31 = arith.mulf %30, %27 : vector<8x128xf32>
    %32 = arith.select %29, %27, %31 : vector<8x128xi1>, vector<8x128xf32>
    %33 = arith.truncf %32 : vector<8x128xf32> to vector<8x128xbf16>
    %c0_21 = arith.constant 0 : index
    %c0_22 = arith.constant 0 : index
    %34 = vector.load %arg8[%c0_21, %c0_22] : memref<128x128xbf16, #tpu.memory_space<vmem>>, vector<128x128xbf16>
    %cst_23 = arith.constant dense<0.000000e+00> : vector<8x128xf32>
    %35 = tpu.matmul %33, %34, %cst_23 {dimension_numbers = #tpu.dot_dimension_numbers<[1], [0], [0], [1], [0, 0, 1, 1], [], []>} : vector<8x128xbf16>, vector<128x128xbf16>, vector<8x128xf32> -> vector<8x128xf32>
    %c0_24 = arith.constant 0 : index
    %c0_25 = arith.constant 0 : index
    %36 = vector.load %arg9[%c0_24, %c0_25] : memref<1x128xf32, #tpu.memory_space<vmem>>, vector<1x128xf32>
    %37 = vector.broadcast %36 : vector<1x128xf32> to vector<8x128xf32>
    %38 = arith.addf %35, %37 : vector<8x128xf32>
    %39 = math.tanh %38 : vector<8x128xf32>
    %c0_26 = arith.constant 0 : index
    %c0_27 = arith.constant 0 : index
    %40 = vector.load %arg10[%c0_26, %c0_27] : memref<8x128xf32, #tpu.memory_space<vmem>>, vector<8x128xf32>
    tpu.vector_store %arg10[%c0_26, %c0_27], %39 {strides = array<i32>} : memref<8x128xf32, #tpu.memory_space<vmem>>, vector<8x128xf32>,
    return
  }
  func.func @transform_0(%arg0: i32) -> (i32, i32) {
    %c0_i32 = arith.constant 0 : i32
    %c0_i32_0 = arith.constant 0 : i32
    return %arg0, %c0_i32 : i32, i32
  }
  func.func @transform_1(%arg0: i32) -> (i32, i32) {
    %c0_i32 = arith.constant 0 : i32
    %c0_i32_0 = arith.constant 0 : i32
    %c0_i32_1 = arith.constant 0 : i32
    return %c0_i32, %c0_i32_0 : i32, i32
  }
  func.func @transform_2(%arg0: i32) -> (i32, i32) {
    %c0_i32 = arith.constant 0 : i32
    %c0_i32_0 = arith.constant 0 : i32
    %c0_i32_1 = arith.constant 0 : i32
    return %c0_i32, %c0_i32_0 : i32, i32
  }
  func.func @transform_3(%arg0: i32) -> (i32, i32) {
    %c0_i32 = arith.constant 0 : i32
    %c0_i32_0 = arith.constant 0 : i32
    %c0_i32_1 = arith.constant 0 : i32
    return %c0_i32, %c0_i32_0 : i32, i32
  }
  func.func @transform_4(%arg0: i32) -> (i32, i32) {
    %c0_i32 = arith.constant 0 : i32
    %c0_i32_0 = arith.constant 0 : i32
    %c0_i32_1 = arith.constant 0 : i32
    return %c0_i32, %c0_i32_0 : i32, i32
  }
  func.func @transform_5(%arg0: i32) -> (i32, i32) {
    %c0_i32 = arith.constant 0 : i32
    %c0_i32_0 = arith.constant 0 : i32
    %c0_i32_1 = arith.constant 0 : i32
    return %c0_i32, %c0_i32_0 : i32, i32
  }
  func.func @transform_6(%arg0: i32) -> (i32, i32) {
    %c0_i32 = arith.constant 0 : i32
    %c0_i32_0 = arith.constant 0 : i32
    %c0_i32_1 = arith.constant 0 : i32
    return %c0_i32, %c0_i32_0 : i32, i32
  }
  func.func @transform_7(%arg0: i32) -> (i32, i32) {
    %c0_i32 = arith.constant 0 : i32
    %c0_i32_0 = arith.constant 0 : i32
    %c0_i32_1 = arith.constant 0 : i32
    return %c0_i32, %c0_i32_0 : i32, i32
  }
  func.func @transform_8(%arg0: i32) -> (i32, i32) {
    %c0_i32 = arith.constant 0 : i32
    %c0_i32_0 = arith.constant 0 : i32
    %c0_i32_1 = arith.constant 0 : i32
    return %c0_i32, %c0_i32_0 : i32, i32
  }
  func.func @transform_9(%arg0: i32) -> (i32, i32) {
    %c0_i32 = arith.constant 0 : i32
    %c0_i32_0 = arith.constant 0 : i32
    return %arg0, %c0_i32 : i32, i32
  }
}

</mosaic_0001>

<llo_original>
// kernel: tpu_custom_call.1
$region0: #{tpu_custom_call.1}
  #allocation0 [shape = 'u32[]', space=smem, size = 0x4, offset = 0x4, fixed_abs, tag = 'smem constant byte address 0x4 - core index']
  #allocation1 [shape = 'u32[144,128]{1,0:T(1,128)}', space=vmem, size = 0x12000, scoped, tag = 'internal scratch']
  %s0 = inlined_call_operand.hbm [shape: bf16[8,128], index: 0, kind: input, shape index: {}]
  %s1 = inlined_call_operand.hbm [shape: bf16[128,128], index: 1, kind: input, shape index: {}]
  %s2 = inlined_call_operand.vmem [shape: f32[1,128], index: 2, kind: input, shape index: {}]
  %s3 = inlined_call_operand.hbm [shape: bf16[128,128], index: 3, kind: input, shape index: {}]
  %s4 = inlined_call_operand.vmem [shape: f32[1,128], index: 4, kind: input, shape index: {}]
  %s5 = inlined_call_operand.hbm [shape: bf16[128,128], index: 5, kind: input, shape index: {}]
  %s6 = inlined_call_operand.vmem [shape: f32[1,128], index: 6, kind: input, shape index: {}]
  %s7 = inlined_call_operand.hbm [shape: bf16[128,128], index: 7, kind: input, shape index: {}]
  %s8 = inlined_call_operand.vmem [shape: f32[1,128], index: 8, kind: input, shape index: {}]
  %s9 = inlined_call_operand.hbm [shape: f32[8,128], index: 9, kind: output, shape index: {}]
  %s10 = sld [smem:[#allocation0]]
  $region66: #{tpu_custom_call.1} parent=0
    _
  %s12 = ssub.s32 1, %s10
  %s13 = scalar_select 0, %s12, %s10
  $region1: #{tpu_custom_call.1} parent=0
    #allocation2 [shape = 'u8[2048]{0}', space=vmem, size = 0x800, scoped, tag = 'input window, operand 0, single buffered']
    #allocation3 [shape = 's32[1]{0}', space=sflag, size = 0x4, scoped, tag = 'scoped memory for tpu_custom_call.1']
    #allocation4 [shape = 's32[1]{0}', space=sflag, size = 0x4, scoped, tag = 'scoped memory for tpu_custom_call.1']
    #allocation5 [shape = 'u8[32768]{0}', space=vmem, size = 0x8000, scoped, tag = 'input window, operand 1, single buffered']
    #allocation6 [shape = 's32[1]{0}', space=sflag, size = 0x4, scoped, tag = 'scoped memory for tpu_custom_call.1']
    #allocation7 [shape = 'u8[32768]{0}', space=vmem, size = 0x8000, scoped, tag = 'input window, operand 3, single buffered']
    #allocation8 [shape = 'u8[32768]{0}', space=vmem, size = 0x8000, scoped, tag = 'input window, operand 5, single buffered']
    #allocation9 [shape = 's32[1]{0}', space=sflag, size = 0x4, scoped, tag = 'scoped memory for tpu_custom_call.1']
    #allocation10 [shape = 'u8[32768]{0}', space=vmem, size = 0x8000, scoped, tag = 'input window, operand 7, single buffered']
    #allocation11 [shape = 'u8[4096]{0}', space=vmem, size = 0x1000, scoped, tag = 'output window, operand 0, single buffered']
    %14 = vsyncpa [#allocation3], 0
    %15 = vsyncpa [#allocation6], 0
    %16 = vsyncpa [#allocation9], 0
    %17 = vsyncpa [#allocation4], 0
    // Predicated region
    $region2: #{tpu_custom_call.1} parent=1 // pred_check
      _
    $region3: #{tpu_custom_call.1} parent=1 // pred_check_branch
      %19 = sbr.rel (0) target = $region5
    $region4: #{tpu_custom_call.1} parent=1 // pred_region
      %s21 = ssub.s32 64, 64
      %22 = vsyncadd [#allocation3], %s21
      %s24 = sshll.u32 [#allocation2], 4
      %s25 = int_to_ptr.vmem [resolvable:$true] %s24
      %27 = dma.hbm_to_vmem [thread:$0]  %s0, 64, %s25, [#allocation3]
    $region5: #{tpu_custom_call.1} parent=1 // pred_fallthru
      _
    // Predicated region
    $region6: #{tpu_custom_call.1} parent=1 // pred_check
      _
    $region7: #{tpu_custom_call.1} parent=1 // pred_check_branch
      %29 = sbr.rel (0) target = $region9
    $region8: #{tpu_custom_call.1} parent=1 // pred_region
      %s31 = ssub.s32 1024, 1024
      %32 = vsyncadd [#allocation6], %s31
      %s33 = sshll.u32 [#allocation5], 4
      %s34 = int_to_ptr.vmem [resolvable:$true] %s33
      %39 = dma.hbm_to_vmem [thread:$0]  %s1, 1024, %s34, [#allocation6], 64, 64, 4
    $region9: #{tpu_custom_call.1} parent=1 // pred_fallthru
      _
    // Predicated region
    $region10: #{tpu_custom_call.1} parent=1 // pred_check
      _
    $region11: #{tpu_custom_call.1} parent=1 // pred_check_branch
      %41 = sbr.rel (0) target = $region13
    $region12: #{tpu_custom_call.1} parent=1 // pred_region
      _
    $region13: #{tpu_custom_call.1} parent=1 // pred_fallthru
      _
    // Predicated region
    $region14: #{tpu_custom_call.1} parent=1 // pred_check
      _
    $region15: #{tpu_custom_call.1} parent=1 // pred_check_branch
      %43 = sbr.rel (0) target = $region17
    $region16: #{tpu_custom_call.1} parent=1 // pred_region
      %s45 = ssub.s32 1024, 1024
      %46 = vsyncadd [#allocation6], %s45
      %s47 = sshll.u32 [#allocation7], 4
      %s48 = int_to_ptr.vmem [resolvable:$true] %s47
      %53 = dma.hbm_to_vmem [thread:$0]  %s3, 1024, %s48, [#allocation6], 64, 64, 4
    $region17: #{tpu_custom_call.1} parent=1 // pred_fallthru
      _
    // Predicated region
    $region18: #{tpu_custom_call.1} parent=1 // pred_check
      _
    $region19: #{tpu_custom_call.1} parent=1 // pred_check_branch
      %55 = sbr.rel (0) target = $region21
    $region20: #{tpu_custom_call.1} parent=1 // pred_region
      _
    $region21: #{tpu_custom_call.1} parent=1 // pred_fallthru
      _
    // Predicated region
    $region22: #{tpu_custom_call.1} parent=1 // pred_check
      _
    $region23: #{tpu_custom_call.1} parent=1 // pred_check_branch
      %57 = sbr.rel (0) target = $region25
    $region24: #{tpu_custom_call.1} parent=1 // pred_region
      %s59 = ssub.s32 1024, 1024
      %60 = vsyncadd [#allocation9], %s59
      %s61 = sshll.u32 [#allocation8], 4
      %s62 = int_to_ptr.vmem [resolvable:$true] %s61
      %67 = dma.hbm_to_vmem [thread:$0]  %s5, 1024, %s62, [#allocation9], 64, 64, 4
    $region25: #{tpu_custom_call.1} parent=1 // pred_fallthru
      _
    // Predicated region
    $region26: #{tpu_custom_call.1} parent=1 // pred_check
      _
    $region27: #{tpu_custom_call.1} parent=1 // pred_check_branch
      %69 = sbr.rel (0) target = $region29
    $region28: #{tpu_custom_call.1} parent=1 // pred_region
      _
    $region29: #{tpu_custom_call.1} parent=1 // pred_fallthru
      _
    // Predicated region
    $region30: #{tpu_custom_call.1} parent=1 // pred_check
      _
    $region31: #{tpu_custom_call.1} parent=1 // pred_check_branch
      %71 = sbr.rel (0) target = $region33
    $region32: #{tpu_custom_call.1} parent=1 // pred_region
      %s73 = ssub.s32 1024, 1024
      %74 = vsyncadd [#allocation9], %s73
      %s75 = sshll.u32 [#allocation10], 4
      %s76 = int_to_ptr.vmem [resolvable:$true] %s75
      %81 = dma.hbm_to_vmem [thread:$0]  %s7, 1024, %s76, [#allocation9], 64, 64, 4
    $region33: #{tpu_custom_call.1} parent=1 // pred_fallthru
      _
    // Predicated region
    $region34: #{tpu_custom_call.1} parent=1 // pred_check
      _
    $region35: #{tpu_custom_call.1} parent=1 // pred_check_branch
      %83 = sbr.rel (0) target = $region37
    $region36: #{tpu_custom_call.1} parent=1 // pred_region
      _
    $region37: #{tpu_custom_call.1} parent=1 // pred_fallthru
      _
    // Predicated region
    $region38: #{tpu_custom_call.1} parent=1 // pred_check
      _
    $region39: #{tpu_custom_call.1} parent=1 // pred_check_branch
      %85 = sbr.rel (0) target = $region41
    $region40: #{tpu_custom_call.1} parent=1 // pred_region
      %86 = dma.done [#allocation3], 64
    $region41: #{tpu_custom_call.1} parent=1 // pred_fallthru
      _
    // Predicated region
    $region42: #{tpu_custom_call.1} parent=1 // pred_check
      _
    $region43: #{tpu_custom_call.1} parent=1 // pred_check_branch
      %88 = sbr.rel (0) target = $region45
    $region44: #{tpu_custom_call.1} parent=1 // pred_region
      %89 = dma.done [#allocation6], 1024
    $region45: #{tpu_custom_call.1} parent=1 // pred_fallthru
      _
    // Predicated region
    $region46: #{tpu_custom_call.1} parent=1 // pred_check
      _
    $region47: #{tpu_custom_call.1} parent=1 // pred_check_branch
      %91 = sbr.rel (0) target = $region49
    $region48: #{tpu_custom_call.1} parent=1 // pred_region
      %92 = dma.done [#allocation6], 1024
    $region49: #{tpu_custom_call.1} parent=1 // pred_fallthru
      _
    // Predicated region
    $region50: #{tpu_custom_call.1} parent=1 // pred_check
      _
    $region51: #{tpu_custom_call.1} parent=1 // pred_check_branch
      %94 = sbr.rel (0) target = $region53
    $region52: #{tpu_custom_call.1} parent=1 // pred_region
      %95 = dma.done [#allocation9], 1024
    $region53: #{tpu_custom_call.1} parent=1 // pred_fallthru
      _
    // Predicated region
    $region54: #{tpu_custom_call.1} parent=1 // pred_check
      _
    $region55: #{tpu_custom_call.1} parent=1 // pred_check_branch
      %97 = sbr.rel (0) target = $region57
    $region56: #{tpu_custom_call.1} parent=1 // pred_region
      %98 = dma.done [#allocation9], 1024
    $region57: #{tpu_custom_call.1} parent=1 // pred_fallthru
      _
    %v100 = vld [vmem:[#allocation2] sm:$0xf]
    %v101 = vld [vmem:[#allocation5] sm:$0xf]
    %v102 = vld [vmem:[#allocation5 + $0x4] sm:$0xf]
    %v103 = vld [vmem:[#allocation5 + $0x8] sm:$0xf]
    %v104 = vld [vmem:[#allocation5 + $0xc] sm:$0xf]
    %v105 = vld [vmem:[#allocation5 + $0x10] sm:$0xf]
    %v106 = vld [vmem:[#allocation5 + $0x14] sm:$0xf]
    %v107 = vld [vmem:[#allocation5 + $0x18] sm:$0xf]
    %v108 = vld [vmem:[#allocation5 + $0x1c] sm:$0xf]
    %v109 = vld [vmem:[#allocation5 + $0x20] sm:$0xf]
    %v110 = vld [vmem:[#allocation5 + $0x24] sm:$0xf]
    %v111 = vld [vmem:[#allocation5 + $0x28] sm:$0xf]
    %v112 = vld [vmem:[#allocation5 + $0x2c] sm:$0xf]
    %v113 = vld [vmem:[#allocation5 + $0x30] sm:$0xf]
    %v114 = vld [vmem:[#allocation5 + $0x34] sm:$0xf]
    %v115 = vld [vmem:[#allocation5 + $0x38] sm:$0xf]
    %v116 = vld [vmem:[#allocation5 + $0x3c] sm:$0xf]
    %v117 = vld [vmem:[%s2] sm:$0x1]
    %v119 = vlaneseq
    %v120 = vshrl.u32 %v119, 7
    %v121 = vsub.s32 0, %v120
    %v122 = vrot.slane %v117, %v121
    %v140 = vunpack.c.l.b16 %v101
    %v141 = vunpack.c.l.b16 %v102
    %v142 = vunpack.c.l.b16 %v103
    %v143 = vunpack.c.l.b16 %v104
    %v144 = vunpack.c.l.b16 %v105
    %v145 = vunpack.c.l.b16 %v106
    %v146 = vunpack.c.l.b16 %v107
    %v147 = vunpack.c.l.b16 %v108
    %v148 = vunpack.c.l.b16 %v109
    %v149 = vunpack.c.l.b16 %v110
    %v150 = vunpack.c.l.b16 %v111
    %v151 = vunpack.c.l.b16 %v112
    %v152 = vunpack.c.l.b16 %v113
    %v153 = vunpack.c.l.b16 %v114
    %v154 = vunpack.c.l.b16 %v115
    %v155 = vunpack.c.l.b16 %v116
    %v156 = vpack.c.b16 %v141, %v140
    %v157 = vpack.c.b16 %v143, %v142
    %v158 = vpack.c.b16 %v145, %v144
    %v159 = vpack.c.b16 %v147, %v146
    %v160 = vpack.c.b16 %v149, %v148
    %v161 = vpack.c.b16 %v151, %v150
    %v162 = vpack.c.b16 %v153, %v152
    %v163 = vpack.c.b16 %v155, %v154
    %172 = vmatprep.subr.bf16.mxu0 0
    %173 = vmatpush1.bf16.msra.mxu0 %v163
    %174 = vmatprep.subr.bf16.mxu0 0
    %175 = vmatpush1.bf16.msra.mxu0 %v162
    %176 = vmatprep.subr.bf16.mxu0 0
    %177 = vmatpush1.bf16.msra.mxu0 %v161
    %178 = vmatprep.subr.bf16.mxu0 0
    %179 = vmatpush1.bf16.msra.mxu0 %v160
    %180 = vmatprep.subr.bf16.mxu0 0
    %181 = vmatpush1.bf16.msra.mxu0 %v159
    %182 = vmatprep.subr.bf16.mxu0 0
    %183 = vmatpush1.bf16.msra.mxu0 %v158
    %184 = vmatprep.subr.bf16.mxu0 0
    %185 = vmatpush1.bf16.msra.mxu0 %v157
    %186 = vmatprep.subr.bf16.mxu0 0
    %187 = vmatpush1.bf16.msra.mxu0 %v156
    %188 = vmatprep.subr.bf16.mxu0 0
    %189 = vmatpush2.bf16.msra.mxu0 0
    %190 = vmatprep.subr.bf16.mxu0 0
    %191 = vmatpush2.bf16.msra.mxu0 0
    %192 = vmatprep.subr.bf16.mxu0 0
    %193 = vmatpush2.bf16.msra.mxu0 0
    %194 = vmatprep.subr.bf16.mxu0 0
    %195 = vmatpush2.bf16.msra.mxu0 0
    %196 = vmatprep.subr.bf16.mxu0 0
    %197 = vmatpush2.bf16.msra.mxu0 0
    %198 = vmatprep.subr.bf16.mxu0 0
    %199 = vmatpush2.bf16.msra.mxu0 0
    %200 = vmatprep.subr.bf16.mxu0 0
    %201 = vmatpush2.bf16.msra.mxu0 0
    %202 = vmatprep.subr.bf16.mxu0 0
    %203 = vmatpush2.bf16.msra.mxu0 0
    %204 = vmatprep.mubr.bf16.mxu0 0
    %205 = vmatmul.mubr.bf16.gmra.mxu0 %v100
    %v206 = vpop.f32.mrf.mxu0
    %v207 = vadd.f32 %v122, %v206
    %v208 = vpop.f32.mrf.mxu0
    %v209 = vpop.f32.mrf.mxu0
    %v210 = vpop.f32.mrf.mxu0
    %211 = vdwg.mxu0
    %vm212 = vcmp.gt.f32.partialorder %v207, 0.0
    %v213 = vmul.f32 %v207, 0.2
    %v214 = vsel %vm212, %v207, %v213
    %v215 = vpack.c.bf16 %v214, %v214
    %v216 = vld [vmem:[#allocation7] sm:$0xf]
    %v217 = vld [vmem:[#allocation7 + $0x4] sm:$0xf]
    %v218 = vld [vmem:[#allocation7 + $0x8] sm:$0xf]
    %v219 = vld [vmem:[#allocation7 + $0xc] sm:$0xf]
    %v220 = vld [vmem:[#allocation7 + $0x10] sm:$0xf]
    %v221 = vld [vmem:[#allocation7 + $0x14] sm:$0xf]
    %v222 = vld [vmem:[#allocation7 + $0x18] sm:$0xf]
    %v223 = vld [vmem:[#allocation7 + $0x1c] sm:$0xf]
    %v224 = vld [vmem:[#allocation7 + $0x20] sm:$0xf]
    %v225 = vld [vmem:[#allocation7 + $0x24] sm:$0xf]
    %v226 = vld [vmem:[#allocation7 + $0x28] sm:$0xf]
    %v227 = vld [vmem:[#allocation7 + $0x2c] sm:$0xf]
    %v228 = vld [vmem:[#allocation7 + $0x30] sm:$0xf]
    %v229 = vld [vmem:[#allocation7 + $0x34] sm:$0xf]
    %v230 = vld [vmem:[#allocation7 + $0x38] sm:$0xf]
    %v231 = vld [vmem:[#allocation7 + $0x3c] sm:$0xf]
    %v232 = vld [vmem:[%s4] sm:$0x1]
    %v234 = vlaneseq
    %v235 = vshrl.u32 %v234, 7
    %v236 = vsub.s32 0, %v235
    %v237 = vrot.slane %v232, %v236
    %v255 = vunpack.c.l.b16 %v216
    %v256 = vunpack.c.l.b16 %v217
    %v257 = vunpack.c.l.b16 %v218
    %v258 = vunpack.c.l.b16 %v219
    %v259 = vunpack.c.l.b16 %v220
    %v260 = vunpack.c.l.b16 %v221
    %v261 = vunpack.c.l.b16 %v222
    %v262 = vunpack.c.l.b16 %v223
    %v263 = vunpack.c.l.b16 %v224
    %v264 = vunpack.c.l.b16 %v225
    %v265 = vunpack.c.l.b16 %v226
    %v266 = vunpack.c.l.b16 %v227
    %v267 = vunpack.c.l.b16 %v228
    %v268 = vunpack.c.l.b16 %v229
    %v269 = vunpack.c.l.b16 %v230
    %v270 = vunpack.c.l.b16 %v231
    %v271 = vpack.c.b16 %v256, %v255
    %v272 = vpack.c.b16 %v258, %v257
    %v273 = vpack.c.b16 %v260, %v259
    %v274 = vpack.c.b16 %v262, %v261
    %v275 = vpack.c.b16 %v264, %v263
    %v276 = vpack.c.b16 %v266, %v265
    %v277 = vpack.c.b16 %v268, %v267
    %v278 = vpack.c.b16 %v270, %v269
    %287 = vmatprep.subr.bf16.mxu0 0
    %288 = vmatpush1.bf16.msra.mxu0 %v278
    %289 = vmatprep.subr.bf16.mxu0 0
    %290 = vmatpush1.bf16.msra.mxu0 %v277
    %291 = vmatprep.subr.bf16.mxu0 0
    %292 = vmatpush1.bf16.msra.mxu0 %v276
    %293 = vmatprep.subr.bf16.mxu0 0
    %294 = vmatpush1.bf16.msra.mxu0 %v275
    %295 = vmatprep.subr.bf16.mxu0 0
    %296 = vmatpush1.bf16.msra.mxu0 %v274
    %297 = vmatprep.subr.bf16.mxu0 0
    %298 = vmatpush1.bf16.msra.mxu0 %v273
    %299 = vmatprep.subr.bf16.mxu0 0
    %300 = vmatpush1.bf16.msra.mxu0 %v272
    %301 = vmatprep.subr.bf16.mxu0 0
    %302 = vmatpush1.bf16.msra.mxu0 %v271
    %303 = vmatprep.subr.bf16.mxu0 0
    %304 = vmatpush2.bf16.msra.mxu0 0
    %305 = vmatprep.subr.bf16.mxu0 0
    %306 = vmatpush2.bf16.msra.mxu0 0
    %307 = vmatprep.subr.bf16.mxu0 0
    %308 = vmatpush2.bf16.msra.mxu0 0
    %309 = vmatprep.subr.bf16.mxu0 0
    %310 = vmatpush2.bf16.msra.mxu0 0
    %311 = vmatprep.subr.bf16.mxu0 0
    %312 = vmatpush2.bf16.msra.mxu0 0
    %313 = vmatprep.subr.bf16.mxu0 0
    %314 = vmatpush2.bf16.msra.mxu0 0
    %315 = vmatprep.subr.bf16.mxu0 0
    %316 = vmatpush2.bf16.msra.mxu0 0
    %317 = vmatprep.subr.bf16.mxu0 0
    %318 = vmatpush2.bf16.msra.mxu0 0
    %319 = vmatprep.mubr.bf16.mxu0 0
    %320 = vmatmul.mubr.bf16.gmra.mxu0 %v215
    %v321 = vpop.f32.mrf.mxu0
    %v322 = vadd.f32 %v237, %v321
    %v323 = vpop.f32.mrf.mxu0
    %v324 = vpop.f32.mrf.mxu0
    %v325 = vpop.f32.mrf.mxu0
    %326 = vdwg.mxu0
    %vm327 = vcmp.gt.f32.partialorder %v322, 0.0
    %v328 = vmul.f32 %v322, 0.2
    %v329 = vsel %vm327, %v322, %v328
    %v330 = vpack.c.bf16 %v329, %v329
    %v331 = vld [vmem:[#allocation8] sm:$0xf]
    %v332 = vld [vmem:[#allocation8 + $0x4] sm:$0xf]
    %v333 = vld [vmem:[#allocation8 + $0x8] sm:$0xf]
    %v334 = vld [vmem:[#allocation8 + $0xc] sm:$0xf]
    %v335 = vld [vmem:[#allocation8 + $0x10] sm:$0xf]
    %v336 = vld [vmem:[#allocation8 + $0x14] sm:$0xf]
    %v337 = vld [vmem:[#allocation8 + $0x18] sm:$0xf]
    %v338 = vld [vmem:[#allocation8 + $0x1c] sm:$0xf]
    %v339 = vld [vmem:[#allocation8 + $0x20] sm:$0xf]
    %v340 = vld [vmem:[#allocation8 + $0x24] sm:$0xf]
    %v341 = vld [vmem:[#allocation8 + $0x28] sm:$0xf]
    %v342 = vld [vmem:[#allocation8 + $0x2c] sm:$0xf]
    %v343 = vld [vmem:[#allocation8 + $0x30] sm:$0xf]
    %v344 = vld [vmem:[#allocation8 + $0x34] sm:$0xf]
    %v345 = vld [vmem:[#allocation8 + $0x38] sm:$0xf]
    %v346 = vld [vmem:[#allocation8 + $0x3c] sm:$0xf]
    %v347 = vld [vmem:[%s6] sm:$0x1]
    %v349 = vlaneseq
    %v350 = vshrl.u32 %v349, 7
    %v351 = vsub.s32 0, %v350
    %v352 = vrot.slane %v347, %v351
    %v370 = vunpack.c.l.b16 %v331
    %v371 = vunpack.c.l.b16 %v332
    %v372 = vunpack.c.l.b16 %v333
    %v373 = vunpack.c.l.b16 %v334
    %v374 = vunpack.c.l.b16 %v335
    %v375 = vunpack.c.l.b16 %v336
    %v376 = vunpack.c.l.b16 %v337
    %v377 = vunpack.c.l.b16 %v338
    %v378 = vunpack.c.l.b16 %v339
    %v379 = vunpack.c.l.b16 %v340
    %v380 = vunpack.c.l.b16 %v341
    %v381 = vunpack.c.l.b16 %v342
    %v382 = vunpack.c.l.b16 %v343
    %v383 = vunpack.c.l.b16 %v344
    %v384 = vunpack.c.l.b16 %v345
    %v385 = vunpack.c.l.b16 %v346
    %v386 = vpack.c.b16 %v371, %v370
    %v387 = vpack.c.b16 %v373, %v372
    %v388 = vpack.c.b16 %v375, %v374
    %v389 = vpack.c.b16 %v377, %v376
    %v390 = vpack.c.b16 %v379, %v378
    %v391 = vpack.c.b16 %v381, %v380
    %v392 = vpack.c.b16 %v383, %v382
    %v393 = vpack.c.b16 %v385, %v384
    %402 = vmatprep.subr.bf16.mxu0 0
    %403 = vmatpush1.bf16.msra.mxu0 %v393
    %404 = vmatprep.subr.bf16.mxu0 0
    %405 = vmatpush1.bf16.msra.mxu0 %v392
    %406 = vmatprep.subr.bf16.mxu0 0
    %407 = vmatpush1.bf16.msra.mxu0 %v391
    %408 = vmatprep.subr.bf16.mxu0 0
    %409 = vmatpush1.bf16.msra.mxu0 %v390
    %410 = vmatprep.subr.bf16.mxu0 0
    %411 = vmatpush1.bf16.msra.mxu0 %v389
    %412 = vmatprep.subr.bf16.mxu0 0
    %413 = vmatpush1.bf16.msra.mxu0 %v388
    %414 = vmatprep.subr.bf16.mxu0 0
    %415 = vmatpush1.bf16.msra.mxu0 %v387
    %416 = vmatprep.subr.bf16.mxu0 0
    %417 = vmatpush1.bf16.msra.mxu0 %v386
    %418 = vmatprep.subr.bf16.mxu0 0
    %419 = vmatpush2.bf16.msra.mxu0 0
    %420 = vmatprep.subr.bf16.mxu0 0
    %421 = vmatpush2.bf16.msra.mxu0 0
    %422 = vmatprep.subr.bf16.mxu0 0
    %423 = vmatpush2.bf16.msra.mxu0 0
    %424 = vmatprep.subr.bf16.mxu0 0
    %425 = vmatpush2.bf16.msra.mxu0 0
    %426 = vmatprep.subr.bf16.mxu0 0
    %427 = vmatpush2.bf16.msra.mxu0 0
    %428 = vmatprep.subr.bf16.mxu0 0
    %429 = vmatpush2.bf16.msra.mxu0 0
    %430 = vmatprep.subr.bf16.mxu0 0
    %431 = vmatpush2.bf16.msra.mxu0 0
    %432 = vmatprep.subr.bf16.mxu0 0
    %433 = vmatpush2.bf16.msra.mxu0 0
    %434 = vmatprep.mubr.bf16.mxu0 0
    %435 = vmatmul.mubr.bf16.gmra.mxu0 %v330
    %v436 = vpop.f32.mrf.mxu0
    %v437 = vadd.f32 %v352, %v436
    %v438 = vpop.f32.mrf.mxu0
    %v439 = vpop.f32.mrf.mxu0
    %v440 = vpop.f32.mrf.mxu0
    %441 = vdwg.mxu0
    %vm442 = vcmp.gt.f32.partialorder %v437, 0.0
    %v443 = vmul.f32 %v437, 0.2
    %v444 = vsel %vm442, %v437, %v443
    %v445 = vpack.c.bf16 %v444, %v444
    %v446 = vld [vmem:[#allocation10] sm:$0xf]
    %v447 = vld [vmem:[#allocation10 + $0x4] sm:$0xf]
    %v448 = vld [vmem:[#allocation10 + $0x8] sm:$0xf]
    %v449 = vld [vmem:[#allocation10 + $0xc] sm:$0xf]
    %v450 = vld [vmem:[#allocation10 + $0x10] sm:$0xf]
    %v451 = vld [vmem:[#allocation10 + $0x14] sm:$0xf]
    %v452 = vld [vmem:[#allocation10 + $0x18] sm:$0xf]
    %v453 = vld [vmem:[#allocation10 + $0x1c] sm:$0xf]
    %v454 = vld [vmem:[#allocation10 + $0x20] sm:$0xf]
    %v455 = vld [vmem:[#allocation10 + $0x24] sm:$0xf]
    %v456 = vld [vmem:[#allocation10 + $0x28] sm:$0xf]
    %v457 = vld [vmem:[#allocation10 + $0x2c] sm:$0xf]
    %v458 = vld [vmem:[#allocation10 + $0x30] sm:$0xf]
    %v459 = vld [vmem:[#allocation10 + $0x34] sm:$0xf]
    %v460 = vld [vmem:[#allocation10 + $0x38] sm:$0xf]
    %v461 = vld [vmem:[#allocation10 + $0x3c] sm:$0xf]
    %v462 = vld [vmem:[%s8] sm:$0x1]
    %v464 = vlaneseq
    %v465 = vshrl.u32 %v464, 7
    %v466 = vsub.s32 0, %v465
    %v467 = vrot.slane %v462, %v466
    %v485 = vunpack.c.l.b16 %v446
    %v486 = vunpack.c.l.b16 %v447
    %v487 = vunpack.c.l.b16 %v448
    %v488 = vunpack.c.l.b16 %v449
    %v489 = vunpack.c.l.b16 %v450
    %v490 = vunpack.c.l.b16 %v451
    %v491 = vunpack.c.l.b16 %v452
    %v492 = vunpack.c.l.b16 %v453
    %v493 = vunpack.c.l.b16 %v454
    %v494 = vunpack.c.l.b16 %v455
    %v495 = vunpack.c.l.b16 %v456
    %v496 = vunpack.c.l.b16 %v457
    %v497 = vunpack.c.l.b16 %v458
    %v498 = vunpack.c.l.b16 %v459
    %v499 = vunpack.c.l.b16 %v460
    %v500 = vunpack.c.l.b16 %v461
    %v501 = vpack.c.b16 %v486, %v485
    %v502 = vpack.c.b16 %v488, %v487
    %v503 = vpack.c.b16 %v490, %v489
    %v504 = vpack.c.b16 %v492, %v491
    %v505 = vpack.c.b16 %v494, %v493
    %v506 = vpack.c.b16 %v496, %v495
    %v507 = vpack.c.b16 %v498, %v497
    %v508 = vpack.c.b16 %v500, %v499
    %517 = vmatprep.subr.bf16.mxu0 0
    %518 = vmatpush1.bf16.msra.mxu0 %v508
    %519 = vmatprep.subr.bf16.mxu0 0
    %520 = vmatpush1.bf16.msra.mxu0 %v507
    %521 = vmatprep.subr.bf16.mxu0 0
    %522 = vmatpush1.bf16.msra.mxu0 %v506
    %523 = vmatprep.subr.bf16.mxu0 0
    %524 = vmatpush1.bf16.msra.mxu0 %v505
    %525 = vmatprep.subr.bf16.mxu0 0
    %526 = vmatpush1.bf16.msra.mxu0 %v504
    %527 = vmatprep.subr.bf16.mxu0 0
    %528 = vmatpush1.bf16.msra.mxu0 %v503
    %529 = vmatprep.subr.bf16.mxu0 0
    %530 = vmatpush1.bf16.msra.mxu0 %v502
    %531 = vmatprep.subr.bf16.mxu0 0
    %532 = vmatpush1.bf16.msra.mxu0 %v501
    %533 = vmatprep.subr.bf16.mxu0 0
    %534 = vmatpush2.bf16.msra.mxu0 0
    %535 = vmatprep.subr.bf16.mxu0 0
    %536 = vmatpush2.bf16.msra.mxu0 0
    %537 = vmatprep.subr.bf16.mxu0 0
    %538 = vmatpush2.bf16.msra.mxu0 0
    %539 = vmatprep.subr.bf16.mxu0 0
    %540 = vmatpush2.bf16.msra.mxu0 0
    %541 = vmatprep.subr.bf16.mxu0 0
    %542 = vmatpush2.bf16.msra.mxu0 0
    %543 = vmatprep.subr.bf16.mxu0 0
    %544 = vmatpush2.bf16.msra.mxu0 0
    %545 = vmatprep.subr.bf16.mxu0 0
    %546 = vmatpush2.bf16.msra.mxu0 0
    %547 = vmatprep.subr.bf16.mxu0 0
    %548 = vmatpush2.bf16.msra.mxu0 0
    %549 = vmatprep.mubr.bf16.mxu0 0
    %550 = vmatmul.mubr.bf16.gmra.mxu0 %v445
    %v551 = vpop.f32.mrf.mxu0
    %v552 = vadd.f32 %v467, %v551
    %v553 = vpop.f32.mrf.mxu0
    %v554 = vpop.f32.mrf.mxu0
    %v555 = vpop.f32.mrf.mxu0
    %556 = vdwg.mxu0
    %v557 = vtanh.pop %v552
    %558 = vst [vmem:[#allocation11] sm:$0xff] %v557
    // Predicated region
    $region58: #{tpu_custom_call.1} parent=1 // pred_check
      _
    $region59: #{tpu_custom_call.1} parent=1 // pred_check_branch
      %560 = sbr.rel (0) target = $region61
    $region60: #{tpu_custom_call.1} parent=1 // pred_region
      %s562 = ssub.s32 128, 128
      %563 = vsyncadd [#allocation4], %s562
      %s565 = sshll.u32 [#allocation11], 4
      %s566 = int_to_ptr.vmem [resolvable:$true] %s565
      %568 = dma.vmem_to_hbm [thread:$0]  %s566, 128, %s9, [#allocation4]
    $region61: #{tpu_custom_call.1} parent=1 // pred_fallthru
      _
    // Predicated region
    $region62: #{tpu_custom_call.1} parent=1 // pred_check
      _
    $region63: #{tpu_custom_call.1} parent=1 // pred_check_branch
      %570 = sbr.rel (0) target = $region65
    $region64: #{tpu_custom_call.1} parent=1 // pred_region
      %571 = dma.done [#allocation4], 128
    $region65: #{tpu_custom_call.1} parent=1 // pred_fallthru
      _
    %572 = vsyncpa [#allocation3], 1
    %573 = vsyncpa [#allocation6], 1
    %574 = vsyncpa [#allocation9], 1
    %575 = vsyncpa [#allocation4], 1

</llo_original>
